<compile_context>
chip_gen: v5e
topology: v5e:2x2
jax: 0.10.0
libtpu: 0.0.40
codegen_flags: <defaults>
</compile_context>

<pallas_src>
import functools

import jax
import jax.numpy as jnp
from jax.experimental import pallas as pl
from jax.experimental.pallas import tpu as pltpu

INV_SQRT2 = 0.7071067811865476
EPS = 1e-5  # nn.InstanceNorm2d default eps


def _round_up(x, m):
    return ((x + m - 1) // m) * m


def _vmem_capacity_bytes():
    """Physical VMEM of the current TPU generation (fallback: 64 MiB, v7x-safe)."""
    try:
        info = pltpu.get_tpu_info()
        for attr in ("vmem_capacity_bytes", "vmem_size_bytes", "vmem_bytes"):
            v = getattr(info, attr, None)
            if v:
                return int(v)
    except Exception:
        pass
    return 64 * 1024 * 1024


def _basic_conv_kernel(x_ref, w_ref, o_ref, conv_ref, rhs_ref, *,
                       kernel_size, wp, wo, qp, q_chunk, c_in_p, n_valid, q_valid):
    """One grid step == (one batch element, one C_out tile).

    x_ref:    (1, C_in_p, Lin)      zero-padded, row-flattened image (bf16)
    w_ref:    (TCo, K*K*C_in_p)     tap-stacked conv weights (bf16)
    o_ref:    (1, TCo, Qp)          output; flat (padded) spatial axis in lanes
    conv_ref: (TCo, Qp) f32         scratch: raw conv result, resident for the norm
    rhs_ref:  (K*K*C_in_p, Qc) bf16 scratch: stacked-tap RHS slab for one chunk
    """
    k = kernel_size

    # Conv as one deep dot per spatial chunk (stride 1):
    #   out[o, y*Wp + x] = sum_{ky,kx,i} w[o,i,ky,kx] * xpad[i, (y+ky)*Wp + (x+kx)]
    # The K*K lane-shifted views of the flat padded image are stacked along the
    # contraction axis in VMEM, so the MXU runs at full depth (K*K*C_in_p) and there
    # are no per-tap f32 adds.
    num_chunks = qp // q_chunk
    for c in range(num_chunks):
        c0 = c * q_chunk
        for ky in range(k):
            for kx in range(k):
                t = ky * k + kx
                off = c0 + ky * wp + kx                          # static python int
                rhs_ref[pl.ds(t * c_in_p, c_in_p), :] = x_ref[0, :, pl.ds(off, q_chunk)]
        conv_ref[:, pl.ds(c0, q_chunk)] = jnp.dot(
            w_ref[...], rhs_ref[...], preferred_element_type=jnp.float32)

    # InstanceNorm2d (affine=False, biased variance over the valid H*W positions,
    # per (n, channel)).  Width-padding and lane-padding columns are masked out of
    # the statistics.  Two-pass (mean, then centered second moment) in f32 to avoid
    # E[x^2]-E[x]^2 cancellation.
    y = conv_ref[...]                                            # (TCo, Qp) f32
    col = jax.lax.broadcasted_iota(jnp.int32, (1, qp), 1)
    mask = jnp.logical_and(col % wp < wo, col < q_valid).astype(jnp.float32)
    inv_n = 1.0 / n_valid
    mean = jnp.sum(y * mask, axis=-1, keepdims=True) * inv_n     # (TCo, 1)
    diff = (y - mean) * mask
    var = jnp.sum(diff * diff, axis=-1, keepdims=True) * inv_n
    yn = (y - mean) * jax.lax.rsqrt(var + EPS)

    # Exact (erf) GELU -- PyTorch nn.GELU(approximate='none') parity.
    o_ref[0] = (0.5 * yn * (1.0 + jax.lax.erf(yn * INV_SQRT2))).astype(o_ref.dtype)


def _pick_tco(c_out, n, cap):
    """Largest C_out tile <= cap dividing c_out; guarantee >= 2 grid steps (v7x TCs)."""
    tco = c_out
    for cand in (256, 128, 64, 32, 16, 8):
        if cand <= cap and c_out % cand == 0:
            tco = cand
            break
    tco = min(tco, c_out)
    # >= 2 grid steps so both v7x TensorCores get work at batch=1, c_out <= one tile.
    if (n * (c_out // tco) < 2 and tco >= 16 and tco % 2 == 0
            and (tco // 2) % 8 == 0):
        tco //= 2
    return tco


@functools.partial(jax.jit, static_argnames=("kernel_size", "stride", "out_dtype"))
def basic_conv(x_nchw, weight_oihw, *, kernel_size=3, stride=1,
               out_dtype=jnp.bfloat16):
    """BasicConv forward (stride=1 path): Conv2d(bias=False) -> InstanceNorm2d -> GELU.

    x: (N, C_in, H, W) NCHW.  weight: (C_out, C_in, K, K) OIHW.
    (bias && norm => bias=False in the PyTorch module, so the conv has no bias.)
    """
    if stride != 1:
        # TODO(synk): stride>1 (Down_scale) / transpose=True (Up_scale) not implemented.
        raise NotImplementedError("Pallas BasicConv path only supports stride=1")

    k = kernel_size
    pad = k // 2
    n, c_in, h, w = x_nchw.shape
    c_out = weight_oihw.shape[0]

    hp, wp = h + 2 * pad, w + 2 * pad
    ho, wo = hp - k + 1, wp - k + 1
    q_valid = ho * wp                      # flat output length incl. width padding
    kk = k * k

    # bf16 sublane pack: pad C_in to a multiple of 16 (zero contribution to the conv).
    c_in_p = _round_up(c_in, 16)

    # Lane-dense flat spatial axis: pad Q to a multiple of 128; chunk it so the
    # stacked-RHS scratch stays <= ~2 MiB per chunk.
    qp = _round_up(q_valid, 128)
    q_chunk = max(128, min(2048, ((2 << 20) // (kk * c_in_p * 2)) // 128 * 128))
    q_chunk = min(q_chunk, qp)
    qp = _round_up(qp, q_chunk)

    # Flattened padded image must cover the largest shifted read.
    need = qp + (k - 1) * wp + (k - 1)
    extra_rows = max(0, -(-(need - hp * wp) // wp))
    lin = (hp + extra_rows) * wp

    x_pad = jnp.pad(
        x_nchw,
        ((0, 0), (0, c_in_p - c_in), (pad, pad + extra_rows), (pad, pad)),
    )
    x_flat = x_pad.reshape(n, c_in_p, lin).astype(jnp.bfloat16)

    # (O, I, Kh, Kw) -> (O, Kh, Kw, I_pad) -> (O, Kh*Kw*I_pad); rows match the RHS
    # stacking order [tap0 channels, tap1 channels, ...].
    w_stk = jnp.pad(weight_oihw, ((0, 0), (0, c_in_p - c_in), (0, 0), (0, 0)))
    w_stk = jnp.transpose(w_stk, (0, 2, 3, 1)).reshape(c_out, kk * c_in_p)
    w_stk = w_stk.astype(jnp.bfloat16)

    # Generation-aware sizing: scoped-VMEM limit and C_out tile.
    vmem_cap = _vmem_capacity_bytes()
    big_vmem = vmem_cap >= 100 * 1024 * 1024   # v5e/v6e (128 MiB) vs v7x (64 MiB)
    vmem_limit = min(int(0.75 * vmem_cap), 100 * 1024 * 1024)
    tco = _pick_tco(c_out, n, cap=256 if big_vmem else 128)

    # Shrink the C_out tile if the per-step residents would blow the scoped limit.
    def step_bytes(t):
        out_b = 2 * t * qp * jnp.dtype(out_dtype).itemsize      # double-buffered out
        return (2 * c_in_p * lin * 2                            # double-buffered image
                + 2 * t * kk * c_in_p * 2                       # double-buffered weights
                + out_b
                + t * qp * 4                                    # conv f32 scratch
                + kk * c_in_p * q_chunk * 2)                    # stacked-RHS scratch

    while (step_bytes(tco) > 0.8 * vmem_limit and tco >= 16 and tco % 2 == 0
           and (tco // 2) % 8 == 0 and c_out % (tco // 2) == 0):
        tco //= 2

    grid = (n, c_out // tco)

    kernel = functools.partial(
        _basic_conv_kernel, kernel_size=k, wp=wp, wo=wo, qp=qp, q_chunk=q_chunk,
        c_in_p=c_in_p, n_valid=ho * wo, q_valid=q_valid)

    out_flat = pl.pallas_call(
        kernel,
        out_shape=jax.ShapeDtypeStruct((n, c_out, qp), out_dtype),
        grid=grid,
        in_specs=[
            pl.BlockSpec((1, c_in_p, lin), lambda b, co: (b, 0, 0)),
            pl.BlockSpec((tco, kk * c_in_p), lambda b, co: (co, 0)),
        ],
        out_specs=pl.BlockSpec((1, tco, qp), lambda b, co: (b, co, 0)),
        scratch_shapes=[
            pltpu.VMEM((tco, qp), jnp.float32),                  # resident conv result
            pltpu.VMEM((kk * c_in_p, q_chunk), jnp.bfloat16),    # stacked-tap RHS slab
        ],
        compiler_params=pltpu.CompilerParams(
            dimension_semantics=("parallel", "parallel"),
            vmem_limit_bytes=vmem_limit,
        ),
    )(x_flat, w_stk)

    # (N, C_out, Qp) -> crop lane/width padding -> NCHW.  No transpose pass needed.
    return out_flat[:, :, :q_valid].reshape(n, c_out, ho, wp)[:, :, :, :wo]


def _reference(x_nchw, weight_oihw, *, kernel_size, stride):
    """Pure-JAX reference (inputs bf16-rounded to match the kernel's MXU operands)."""
    pad = kernel_size // 2
    xq = x_nchw.astype(jnp.bfloat16).astype(jnp.float32)
    wq = weight_oihw.astype(jnp.bfloat16).astype(jnp.float32)
    dn = jax.lax.conv_dimension_numbers(
        x_nchw.shape, weight_oihw.shape, ("NCHW", "OIHW", "NCHW"))
    y = jax.lax.conv_general_dilated(
        xq, wq, window_strides=(stride, stride),
        padding=((pad, pad), (pad, pad)), dimension_numbers=dn)
    mean = jnp.mean(y, axis=(2, 3), keepdims=True)
    var = jnp.mean((y - mean) ** 2, axis=(2, 3), keepdims=True)
    yn = (y - mean) * jax.lax.rsqrt(var + EPS)
    return 0.5 * yn * (1.0 + jax.lax.erf(yn * INV_SQRT2))


if __name__ == "__main__":
    # Small shapes consistent with the module: N=2, C_in=4, C_out=8, 16x16, 3x3/s1.
    N, C_IN, C_OUT, H, W = 2, 4, 8, 16, 16
    K, STRIDE = 3, 1

    key = jax.random.PRNGKey(0)
    kx_key, kw_key = jax.random.split(key)
    x = jax.random.normal(kx_key, (N, C_IN, H, W), dtype=jnp.float32)
    weight = jax.random.normal(kw_key, (C_OUT, C_IN, K, K), dtype=jnp.float32)
    weight = weight * (1.0 / (C_IN * K * K) ** 0.5)

    ref = jax.block_until_ready(_reference(x, weight, kernel_size=K, stride=STRIDE))

    # f32 output path: tight parity check.
    out_f32 = jax.block_until_ready(
        basic_conv(x, weight, kernel_size=K, stride=STRIDE, out_dtype=jnp.float32))
    assert out_f32.shape == (N, C_OUT, H, W), out_f32.shape
    err_f32 = float(jnp.max(jnp.abs(out_f32 - ref)))
    assert err_f32 < 5e-3, err_f32

    # bf16 output path (production default: halves HBM writeback).
    out_bf16 = jax.block_until_ready(
        basic_conv(x, weight, kernel_size=K, stride=STRIDE, out_dtype=jnp.bfloat16))
    err_bf16 = float(jnp.max(jnp.abs(out_bf16.astype(jnp.float32) - ref)))
    assert err_bf16 < 3e-2, err_bf16

    print("KERNEL_OK")
</pallas_src>

<mosaic_0001>
module attributes {stable_mosaic.version = 11 : i64} {
  func.func @_basic_conv_kernel(%arg0: i32, %arg1: i32, %arg2: memref<1x16x432xbf16, #tpu.memory_space<vmem>>, %arg3: memref<8x144xbf16, #tpu.memory_space<vmem>>, %arg4: memref<1x8x384xf32, #tpu.memory_space<vmem>>, %arg5: memref<8x384xf32, #tpu.memory_space<vmem>>, %arg6: memref<144x384xbf16, #tpu.memory_space<vmem>>) attributes {dimension_semantics = [#tpu.dimension_semantics<parallel>, #tpu.dimension_semantics<parallel>], iteration_bounds = array<i64: 2, 1>, scalar_prefetch = 0 : i64, scratch_operands = 2 : i64, tpu.core_type = #tpu.core_type<tc>, window_params = [{transform_indices = @transform_0, window_bounds = array<i64: 1, 16, 432>}, {transform_indices = @transform_1, window_bounds = array<i64: 8, 144>}, {transform_indices = @transform_2, window_bounds = array<i64: 1, 8, 384>}]} {
    %c0 = arith.constant 0 : index
    %c0_0 = arith.constant 0 : index
    %c0_1 = arith.constant 0 : index
    %0 = vector.load %arg2[%c0, %c0_0, %c0_1] : memref<1x16x432xbf16, #tpu.memory_space<vmem>>, vector<1x16x384xbf16>
    %1 = vector.shape_cast %0 : vector<1x16x384xbf16> to vector<16x384xbf16>
    %c0_2 = arith.constant 0 : index
    %c0_3 = arith.constant 0 : index
    %2 = vector.load %arg6[%c0_2, %c0_3] : memref<144x384xbf16, #tpu.memory_space<vmem>>, vector<16x384xbf16>
    tpu.vector_store %arg6[%c0_2, %c0_3], %1 {strides = array<i32>} : memref<144x384xbf16, #tpu.memory_space<vmem>>, vector<16x384xbf16>,
    %c0_4 = arith.constant 0 : index
    %c0_5 = arith.constant 0 : index
    %c1 = arith.constant 1 : index
    %3 = vector.load %arg2[%c0_4, %c0_5, %c1] : memref<1x16x432xbf16, #tpu.memory_space<vmem>>, vector<1x16x384xbf16>
    %4 = vector.shape_cast %3 : vector<1x16x384xbf16> to vector<16x384xbf16>
    %c16 = arith.constant 16 : index
    %c0_6 = arith.constant 0 : index
    %5 = vector.load %arg6[%c16, %c0_6] : memref<144x384xbf16, #tpu.memory_space<vmem>>, vector<16x384xbf16>
    tpu.vector_store %arg6[%c16, %c0_6], %4 {strides = array<i32>} : memref<144x384xbf16, #tpu.memory_space<vmem>>, vector<16x384xbf16>,
    %c0_7 = arith.constant 0 : index
    %c0_8 = arith.constant 0 : index
    %c2 = arith.constant 2 : index
    %6 = vector.load %arg2[%c0_7, %c0_8, %c2] : memref<1x16x432xbf16, #tpu.memory_space<vmem>>, vector<1x16x384xbf16>
    %7 = vector.shape_cast %6 : vector<1x16x384xbf16> to vector<16x384xbf16>
    %c32 = arith.constant 32 : index
    %c0_9 = arith.constant 0 : index
    %8 = vector.load %arg6[%c32, %c0_9] : memref<144x384xbf16, #tpu.memory_space<vmem>>, vector<16x384xbf16>
    tpu.vector_store %arg6[%c32, %c0_9], %7 {strides = array<i32>} : memref<144x384xbf16, #tpu.memory_space<vmem>>, vector<16x384xbf16>,
    %c0_10 = arith.constant 0 : index
    %c0_11 = arith.constant 0 : index
    %c18 = arith.constant 18 : index
    %9 = vector.load %arg2[%c0_10, %c0_11, %c18] : memref<1x16x432xbf16, #tpu.memory_space<vmem>>, vector<1x16x384xbf16>
    %10 = vector.shape_cast %9 : vector<1x16x384xbf16> to vector<16x384xbf16>
    %c48 = arith.constant 48 : index
    %c0_12 = arith.constant 0 : index
    %11 = vector.load %arg6[%c48, %c0_12] : memref<144x384xbf16, #tpu.memory_space<vmem>>, vector<16x384xbf16>
    tpu.vector_store %arg6[%c48, %c0_12], %10 {strides = array<i32>} : memref<144x384xbf16, #tpu.memory_space<vmem>>, vector<16x384xbf16>,
    %c0_13 = arith.constant 0 : index
    %c0_14 = arith.constant 0 : index
    %c19 = arith.constant 19 : index
    %12 = vector.load %arg2[%c0_13, %c0_14, %c19] : memref<1x16x432xbf16, #tpu.memory_space<vmem>>, vector<1x16x384xbf16>
    %13 = vector.shape_cast %12 : vector<1x16x384xbf16> to vector<16x384xbf16>
    %c64 = arith.constant 64 : index
    %c0_15 = arith.constant 0 : index
    %14 = vector.load %arg6[%c64, %c0_15] : memref<144x384xbf16, #tpu.memory_space<vmem>>, vector<16x384xbf16>
    tpu.vector_store %arg6[%c64, %c0_15], %13 {strides = array<i32>} : memref<144x384xbf16, #tpu.memory_space<vmem>>, vector<16x384xbf16>,
    %c0_16 = arith.constant 0 : index
    %c0_17 = arith.constant 0 : index
    %c20 = arith.constant 20 : index
    %15 = vector.load %arg2[%c0_16, %c0_17, %c20] : memref<1x16x432xbf16, #tpu.memory_space<vmem>>, vector<1x16x384xbf16>
    %16 = vector.shape_cast %15 : vector<1x16x384xbf16> to vector<16x384xbf16>
    %c80 = arith.constant 80 : index
    %c0_18 = arith.constant 0 : index
    %17 = vector.load %arg6[%c80, %c0_18] : memref<144x384xbf16, #tpu.memory_space<vmem>>, vector<16x384xbf16>
    tpu.vector_store %arg6[%c80, %c0_18], %16 {strides = array<i32>} : memref<144x384xbf16, #tpu.memory_space<vmem>>, vector<16x384xbf16>,
    %c0_19 = arith.constant 0 : index
    %c0_20 = arith.constant 0 : index
    %c36 = arith.constant 36 : index
    %18 = vector.load %arg2[%c0_19, %c0_20, %c36] : memref<1x16x432xbf16, #tpu.memory_space<vmem>>, vector<1x16x384xbf16>
    %19 = vector.shape_cast %18 : vector<1x16x384xbf16> to vector<16x384xbf16>
    %c96 = arith.constant 96 : index
    %c0_21 = arith.constant 0 : index
    %20 = vector.load %arg6[%c96, %c0_21] : memref<144x384xbf16, #tpu.memory_space<vmem>>, vector<16x384xbf16>
    tpu.vector_store %arg6[%c96, %c0_21], %19 {strides = array<i32>} : memref<144x384xbf16, #tpu.memory_space<vmem>>, vector<16x384xbf16>,
    %c0_22 = arith.constant 0 : index
    %c0_23 = arith.constant 0 : index
    %c37 = arith.constant 37 : index
    %21 = vector.load %arg2[%c0_22, %c0_23, %c37] : memref<1x16x432xbf16, #tpu.memory_space<vmem>>, vector<1x16x384xbf16>
    %22 = vector.shape_cast %21 : vector<1x16x384xbf16> to vector<16x384xbf16>
    %c112 = arith.constant 112 : index
    %c0_24 = arith.constant 0 : index
    %23 = vector.load %arg6[%c112, %c0_24] : memref<144x384xbf16, #tpu.memory_space<vmem>>, vector<16x384xbf16>
    tpu.vector_store %arg6[%c112, %c0_24], %22 {strides = array<i32>} : memref<144x384xbf16, #tpu.memory_space<vmem>>, vector<16x384xbf16>,
    %c0_25 = arith.constant 0 : index
    %c0_26 = arith.constant 0 : index
    %c38 = arith.constant 38 : index
    %24 = vector.load %arg2[%c0_25, %c0_26, %c38] : memref<1x16x432xbf16, #tpu.memory_space<vmem>>, vector<1x16x384xbf16>
    %25 = vector.shape_cast %24 : vector<1x16x384xbf16> to vector<16x384xbf16>
    %c128 = arith.constant 128 : index
    %c0_27 = arith.constant 0 : index
    %26 = vector.load %arg6[%c128, %c0_27] : memref<144x384xbf16, #tpu.memory_space<vmem>>, vector<16x384xbf16>
    tpu.vector_store %arg6[%c128, %c0_27], %25 {strides = array<i32>} : memref<144x384xbf16, #tpu.memory_space<vmem>>, vector<16x384xbf16>,
    %c0_28 = arith.constant 0 : index
    %c0_29 = arith.constant 0 : index
    %27 = vector.load %arg3[%c0_28, %c0_29] : memref<8x144xbf16, #tpu.memory_space<vmem>>, vector<8x144xbf16>
    %c0_30 = arith.constant 0 : index
    %c0_31 = arith.constant 0 : index
    %28 = vector.load %arg6[%c0_30, %c0_31] : memref<144x384xbf16, #tpu.memory_space<vmem>>, vector<144x384xbf16>
    %cst = arith.constant dense<0.000000e+00> : vector<8x384xf32>
    %29 = tpu.matmul %27, %28, %cst {dimension_numbers = #tpu.dot_dimension_numbers<[1], [0], [0], [1], [0, 0, 1, 1], [], []>} : vector<8x144xbf16>, vector<144x384xbf16>, vector<8x384xf32> -> vector<8x384xf32>
    %c0_32 = arith.constant 0 : index
    %c0_33 = arith.constant 0 : index
    %30 = vector.load %arg5[%c0_32, %c0_33] : memref<8x384xf32, #tpu.memory_space<vmem>>, vector<8x384xf32>
    tpu.vector_store %arg5[%c0_32, %c0_33], %29 {strides = array<i32>} : memref<8x384xf32, #tpu.memory_space<vmem>>, vector<8x384xf32>,
    %c0_34 = arith.constant 0 : index
    %c0_35 = arith.constant 0 : index
    %31 = vector.load %arg5[%c0_34, %c0_35] : memref<8x384xf32, #tpu.memory_space<vmem>>, vector<8x384xf32>
    %32 = tpu.iota {dimensions = array<i32: 1>} : vector<1x384xi32>
    %c18_i32 = arith.constant 18 : i32
    %c0_i32 = arith.constant 0 : i32
    %33 = arith.cmpi eq, %c18_i32, %c0_i32 : i32
    %c1_i32 = arith.constant 1 : i32
    %34 = arith.select %33, %c1_i32, %c18_i32 : i32
    %35 = vector.broadcast %34 : i32 to vector<1x384xi32>
    %36 = arith.remsi %32, %35 : vector<1x384xi32>
    %c0_i32_36 = arith.constant 0 : i32
    %37 = vector.broadcast %c0_i32_36 : i32 to vector<1x384xi32>
    %38 = arith.cmpi ne, %36, %37 : vector<1x384xi32>
    %c0_i32_37 = arith.constant 0 : i32
    %39 = vector.broadcast %c0_i32_37 : i32 to vector<1x384xi32>
    %40 = arith.cmpi slt, %36, %39 : vector<1x384xi32>
    %c0_i32_38 = arith.constant 0 : i32
    %41 = arith.cmpi slt, %34, %c0_i32_38 : i32
    %42 = vector.broadcast %41 : i1 to vector<1x384xi1>
    %43 = vector.broadcast %42 : vector<1x384xi1> to vector<1x384xi1>
    %44 = arith.xori %40, %43 : vector<1x384xi1>
    %45 = arith.andi %44, %38 : vector<1x384xi1>
    %46 = vector.broadcast %34 : i32 to vector<1x384xi32>
    %47 = arith.addi %36, %46 : vector<1x384xi32>
    %48 = arith.select %45, %47, %36 : vector<1x384xi1>, vector<1x384xi32>
    %c16_i32 = arith.constant 16 : i32
    %49 = vector.broadcast %c16_i32 : i32 to vector<1x384xi32>
    %50 = arith.cmpi slt, %48, %49 : vector<1x384xi32>
    %c288_i32 = arith.constant 288 : i32
    %51 = vector.broadcast %c288_i32 : i32 to vector<1x384xi32>
    %52 = arith.cmpi slt, %32, %51 : vector<1x384xi32>
    %53 = arith.andi %50, %52 : vector<1x384xi1>
    %54 = arith.extui %53 : vector<1x384xi1> to vector<1x384xi32>
    %55 = arith.sitofp %54 : vector<1x384xi32> to vector<1x384xf32>
    %56 = vector.broadcast %55 : vector<1x384xf32> to vector<8x384xf32>
    %57 = arith.mulf %31, %56 : vector<8x384xf32>
    %cst_39 = arith.constant dense<0.000000e+00> : vector<8xf32>
    %58 = vector.multi_reduction <add>, %57, %cst_39 [1] : vector<8x384xf32> to vector<8xf32>
    %59 = vector.shape_cast %58 : vector<8xf32> to vector<8x1xf32>
    %cst_40 = arith.constant 3.906250e-03 : f32
    %60 = vector.broadcast %cst_40 : f32 to vector<8x1xf32>
    %61 = arith.mulf %59, %60 : vector<8x1xf32>
    %62 = vector.broadcast %61 : vector<8x1xf32> to vector<8x384xf32>
    %63 = arith.subf %31, %62 : vector<8x384xf32>
    %64 = vector.broadcast %55 : vector<1x384xf32> to vector<8x384xf32>
    %65 = arith.mulf %63, %64 : vector<8x384xf32>
    %66 = arith.mulf %65, %65 : vector<8x384xf32>
    %cst_41 = arith.constant dense<0.000000e+00> : vector<8xf32>
    %67 = vector.multi_reduction <add>, %66, %cst_41 [1] : vector<8x384xf32> to vector<8xf32>
    %68 = vector.shape_cast %67 : vector<8xf32> to vector<8x1xf32>
    %cst_42 = arith.constant 3.906250e-03 : f32
    %69 = vector.broadcast %cst_42 : f32 to vector<8x1xf32>
    %70 = arith.mulf %68, %69 : vector<8x1xf32>
    %71 = vector.broadcast %61 : vector<8x1xf32> to vector<8x384xf32>
    %72 = arith.subf %31, %71 : vector<8x384xf32>
    %cst_43 = arith.constant 9.99999974E-6 : f32
    %73 = vector.broadcast %cst_43 : f32 to vector<8x1xf32>
    %74 = arith.addf %70, %73 : vector<8x1xf32>
    %75 = math.rsqrt %74 : vector<8x1xf32>
    %76 = vector.broadcast %75 : vector<8x1xf32> to vector<8x384xf32>
    %77 = arith.mulf %72, %76 : vector<8x384xf32>
    %cst_44 = arith.constant 5.000000e-01 : f32
    %78 = vector.broadcast %cst_44 : f32 to vector<8x384xf32>
    %79 = arith.mulf %78, %77 : vector<8x384xf32>
    %cst_45 = arith.constant 0.707106769 : f32
    %80 = vector.broadcast %cst_45 : f32 to vector<8x384xf32>
    %81 = arith.mulf %77, %80 : vector<8x384xf32>
    %82 = math.erf %81 : vector<8x384xf32>
    %cst_46 = arith.constant 1.000000e+00 : f32
    %83 = vector.broadcast %cst_46 : f32 to vector<8x384xf32>
    %84 = arith.addf %83, %82 : vector<8x384xf32>
    %85 = arith.mulf %79, %84 : vector<8x384xf32>
    %c0_47 = arith.constant 0 : index
    %c0_48 = arith.constant 0 : index
    %c0_49 = arith.constant 0 : index
    %86 = vector.load %arg4[%c0_47, %c0_48, %c0_49] : memref<1x8x384xf32, #tpu.memory_space<vmem>>, vector<1x8x384xf32>
    %87 = vector.shape_cast %86 : vector<1x8x384xf32> to vector<8x384xf32>
    %88 = vector.shape_cast %85 : vector<8x384xf32> to vector<1x8x384xf32>
    tpu.vector_store %arg4[%c0_47, %c0_48, %c0_49], %88 {strides = array<i32>} : memref<1x8x384xf32, #tpu.memory_space<vmem>>, vector<1x8x384xf32>,
    return
  }
  func.func @transform_0(%arg0: i32, %arg1: i32) -> (i32, i32, i32) {
    %c0_i32 = arith.constant 0 : i32
    %c0_i32_0 = arith.constant 0 : i32
    %c0_i32_1 = arith.constant 0 : i32
    return %arg0, %c0_i32, %c0_i32_0 : i32, i32, i32
  }
  func.func @transform_1(%arg0: i32, %arg1: i32) -> (i32, i32) {
    %c0_i32 = arith.constant 0 : i32
    %c0_i32_0 = arith.constant 0 : i32
    return %arg1, %c0_i32 : i32, i32
  }
  func.func @transform_2(%arg0: i32, %arg1: i32) -> (i32, i32, i32) {
    %c0_i32 = arith.constant 0 : i32
    %c0_i32_0 = arith.constant 0 : i32
    return %arg0, %arg1, %c0_i32 : i32, i32, i32
  }
}

</mosaic_0001>

<llo_original>
// kernel: basic_conv.1
$region0: #{basic_conv.1}
  #allocation0 [shape = 'u32[]', space=smem, size = 0x4, offset = 0x4, fixed_abs, tag = 'smem constant byte address 0x4 - core index']
  #allocation1 [shape = 'u32[72,128]{1,0:T(1,128)}', space=vmem, size = 0x9000, scoped, tag = 'internal scratch']
  #allocation2 [shape = 'f32[8,384]{1,0:T(8,128)}', space=vmem, size = 0x3000, scoped, tag = 'scratch operand']
  #allocation3 [shape = 'bf16[144,384]{1,0:T(8,128)(2,1)}', space=vmem, size = 0x1b000, scoped, tag = 'scratch operand']
  %s0 = inlined_call_operand.vmem [shape: bf16[2,16,432], index: 0, kind: input, shape index: {}]
  %s1 = inlined_call_operand.vmem [shape: bf16[8,144], index: 1, kind: input, shape index: {}]
  %s2 = inlined_call_operand.vmem [shape: f32[2,8,384], index: 2, kind: output, shape index: {}]
  %s3 = sld [smem:[#allocation0]]
  $region41: #{basic_conv.1} parent=0
    _
  %s5 = ssub.s32 1, %s3
  %s6 = scalar_select 0, %s5, %s3
  loop: start=0, step=1, limit=4
  $region2: #{basic_conv.1} parent=0 // loop_pre_header
    _
  $region3: #{basic_conv.1} parent=0 // loop_header
    %s8 = sphi 0, %s12
    %p9 = scmp.ge.s32.totalorder %s8, 4
    %s15 = sphi 0, %s27
    %s16 = sphi 0, %s23
    %s17 = sphi 0, %s15
    %s18 = sphi 0, %s16
    %s19 = sphi 0, %s17
    %s20 = sphi 0, %s18
    %s30 = sphi 0, %s32
    %s33 = sphi 0, %s30
    %s34 = sphi 0, %s33
    %s50 = sphi 0, %s34
    %s56 = sphi 0, %s58
    %s59 = sphi 0, %s56
    %s60 = sphi 0, %s59
    %s76 = sphi 0, %s60
    %s84 = sphi 0, %s86
    %s87 = sphi 0, %s84
    %s88 = sphi 0, %s87
    %s104 = sphi 0, %s88
  $region4: #{basic_conv.1} parent=0 // loop_header_branch
    %11 = sbr.rel (%p9) target = $region8
  $region5: #{basic_conv.1} parent=0 // loop_body
    %s13 = ssub.s32 %s8, 1
    %s14 = ssub.s32 %s8, 2
    %s21 = sadd.s32 1, %s16
    %p22 = scmp.ge.s32.totalorder %s21, 1
    %s23 = scalar_select %p22, 0, %s21
    %s24 = sadd.s32 1, %s15
    %s25 = scalar_select %p22, %s24, %s15
    %p26 = scmp.ge.s32.totalorder %s25, 2
    %s27 = scalar_select %p26, 0, %s25
    %s28 = ssub.s32 %s15, %s27
    %p29 = scmp.eq.s32.totalorder %s28, 0
    %s31 = sadd.s32 %s30, 1
    %s32 = scalar_select %p29, %s30, %s31
    %p35 = pneg %p29
    %p36 = scmp.eq.s32.totalorder %s8, 1
    %p37 = por %p35, %p36
    %p38 = scmp.ne.s32.totalorder %s30, %s33
    %p39 = scmp.eq.s32.totalorder %s8, 0
    %p40 = por %p38, %p39
    %p41 = scmp.ne.s32.totalorder %s30, %s33
    %p42 = scmp.eq.s32.totalorder %s13, 1
    %p43 = por %p41, %p42
    %p44 = scmp.ne.s32.totalorder %s33, %s34
    %p45 = scmp.eq.s32.totalorder %s13, 0
    %p46 = por %p44, %p45
    %p47 = scmp.ne.s32.totalorder %s33, %s34
    %p48 = scmp.eq.s32.totalorder %s14, 1
    %p49 = por %p47, %p48
    %p51 = scmp.ne.s32.totalorder %s34, %s50
    %p52 = scmp.eq.s32.totalorder %s14, 0
    %p53 = por %p51, %p52
    %s54 = ssub.s32 %s16, %s23
    %p55 = scmp.eq.s32.totalorder %s54, 0
    %s57 = sadd.s32 %s56, 1
    %s58 = scalar_select %p55, %s56, %s57
    %p61 = pneg %p55
    %p62 = scmp.eq.s32.totalorder %s8, 1
    %p63 = por %p61, %p62
    %p64 = scmp.ne.s32.totalorder %s56, %s59
    %p65 = scmp.eq.s32.totalorder %s8, 0
    %p66 = por %p64, %p65
    %p67 = scmp.ne.s32.totalorder %s56, %s59
    %p68 = scmp.eq.s32.totalorder %s13, 1
    %p69 = por %p67, %p68
    %p70 = scmp.ne.s32.totalorder %s59, %s60
    %p71 = scmp.eq.s32.totalorder %s13, 0
    %p72 = por %p70, %p71
    %p73 = scmp.ne.s32.totalorder %s59, %s60
    %p74 = scmp.eq.s32.totalorder %s14, 1
    %p75 = por %p73, %p74
    %p77 = scmp.ne.s32.totalorder %s60, %s76
    %p78 = scmp.eq.s32.totalorder %s14, 0
    %p79 = por %p77, %p78
    %s80 = ssub.s32 %s15, %s27
    %s81 = ssub.s32 %s16, %s23
    %s82 = sor.u32 %s80, %s81
    %p83 = scmp.eq.s32.totalorder %s82, 0
    %s85 = sadd.s32 %s84, 1
    %s86 = scalar_select %p83, %s84, %s85
    %p89 = pneg %p83
    %p90 = scmp.eq.s32.totalorder %s8, 1
    %p91 = por %p89, %p90
    %p92 = scmp.ne.s32.totalorder %s84, %s87
    %p93 = scmp.eq.s32.totalorder %s8, 0
    %p94 = por %p92, %p93
    %p95 = scmp.ne.s32.totalorder %s84, %s87
    %p96 = scmp.eq.s32.totalorder %s13, 1
    %p97 = por %p95, %p96
    %p98 = scmp.ne.s32.totalorder %s87, %s88
    %p99 = scmp.eq.s32.totalorder %s13, 0
    %p100 = por %p98, %p99
    %p101 = scmp.ne.s32.totalorder %s87, %s88
    %p102 = scmp.eq.s32.totalorder %s14, 1
    %p103 = por %p101, %p102
    %p105 = scmp.ne.s32.totalorder %s88, %s104
    %p106 = scmp.eq.s32.totalorder %s14, 0
    %p107 = por %p105, %p106
    %p108 = scmp.le.s32.totalorder 1, %s8
    %p109 = scmp.lt.s32.totalorder %s8, 3
    %p110 = pnand %p108, %p109
    %p111 = pneg %p110
    // Predicated region
    $region9: #{basic_conv.1} parent=5 // pred_check
      _
    $region10: #{basic_conv.1} parent=5 // pred_check_branch
      %113 = sbr.rel (%p110) target = $region12
    $region11: #{basic_conv.1} parent=5 // pred_region
      %s114 = ssub.s32 %s8, 1
      // Predicated region
      $region13: #{basic_conv.1} parent=11 // pred_check
        %p115 = pneg %p72
      $region14: #{basic_conv.1} parent=11 // pred_check_branch
        %117 = sbr.rel (%p115) target = $region16
      $region15: #{basic_conv.1} parent=11 // pred_region
        %p118 = scmp.lt.s32.totalorder %s18, 0
        %s119 = scalar_select %p118, %s18, 0
        %s120 = smul.addr %s119, 2
        %s121 = smul.addr %s120, 4
        %s122 = scalar_lea.vmem %s1, %s121
      $region16: #{basic_conv.1} parent=11 // pred_fallthru
        _
    $region12: #{basic_conv.1} parent=5 // pred_fallthru
      _
    %p123 = scmp.lt.s32.totalorder %s8, 2
    // Predicated region
    $region17: #{basic_conv.1} parent=5 // pred_check
      %p124 = pneg %p123
    $region18: #{basic_conv.1} parent=5 // pred_check_branch
      %126 = sbr.rel (%p124) target = $region20
    $region19: #{basic_conv.1} parent=5 // pred_region
      // Predicated region
      $region21: #{basic_conv.1} parent=19 // pred_check
        %p127 = pneg %p40
      $region22: #{basic_conv.1} parent=19 // pred_check_branch
        %129 = sbr.rel (%p127) target = $region24
      $region23: #{basic_conv.1} parent=19 // pred_region
        %p130 = scmp.lt.s32.totalorder %s15, 1
        %s131 = scalar_select %p130, %s15, 1
        %s132 = smul.addr %s131, 8
        %s133 = smul.addr %s132, 4
        %s134 = scalar_lea.vmem %s0, %s133
      $region24: #{basic_conv.1} parent=19 // pred_fallthru
        _
    $region20: #{basic_conv.1} parent=5 // pred_fallthru
      _
    %p135 = scmp.le.s32.totalorder 1, %s8
    %p136 = scmp.lt.s32.totalorder %s8, 3
    %p137 = pnand %p135, %p136
    %p138 = pneg %p137
    // Predicated region
    $region25: #{basic_conv.1} parent=5 // pred_check
      _
    $region26: #{basic_conv.1} parent=5 // pred_check_branch
      %140 = sbr.rel (%p137) target = $region28
    $region27: #{basic_conv.1} parent=5 // pred_region
      %s141 = ssub.s32 %s8, 1
      %p142 = scmp.lt.s32.totalorder %s17, 1
      %s143 = scalar_select %p142, %s17, 1
      %s144 = smul.addr %s143, 8
      %s145 = smul.addr %s144, 4
      %s146 = scalar_lea.vmem %s0, %s145
      %p147 = pneg %p46
      %p148 = pneg %p43
      %p149 = scmp.lt.s32.totalorder %s18, 0
      %s150 = scalar_select %p149, %s18, 0
      %s151 = smul.addr %s150, 2
      %s152 = smul.addr %s151, 4
      %s153 = scalar_lea.vmem %s1, %s152
      %p154 = pneg %p72
      %p155 = pneg %p69
      %p156 = pneg %p100
      %p157 = pneg %p97
      %p158 = scmp.lt.s32.totalorder %s17, 1
      %s159 = scalar_select %p158, %s17, 1
      %p160 = scmp.lt.s32.totalorder %s18, 0
      %s161 = scalar_select %p160, %s18, 0
      %s162 = smul.addr %s161, 3
      %s163 = smul.addr %s159, 3
      %s164 = sadd.s32 %s162, %s163
      %s165 = smul.addr %s164, 8
      %s166 = scalar_lea.vmem %s2, %s165
      %p167 = scmp.lt.s32.totalorder %s17, 1
      %s168 = scalar_select %p167, %s17, 1
      %s169 = smul.addr %s168, 8
      %s170 = smul.addr %s169, 4
      %s171 = scalar_lea.vmem %s0, %s170
      %p172 = scmp.lt.s32.totalorder %s18, 0
      %s173 = scalar_select %p172, %s18, 0
      %s174 = smul.addr %s173, 2
      %s175 = smul.addr %s174, 4
      %s176 = scalar_lea.vmem %s1, %s175
      %p177 = scmp.lt.s32.totalorder %s17, 1
      %s178 = scalar_select %p177, %s17, 1
      %p179 = scmp.lt.s32.totalorder %s18, 0
      %s180 = scalar_select %p179, %s18, 0
      %s181 = smul.addr %s180, 3
      %s182 = smul.addr %s178, 3
      %s183 = sadd.s32 %s181, %s182
      %s184 = smul.addr %s183, 8
      %s185 = scalar_lea.vmem %s2, %s184
      %v187 = vld [vmem:[%s171] sm:$0xff]
      %v188 = vld [vmem:[%s171 + $0x8] sm:$0xf]
      %v189 = vld [vmem:[%s171 + $0x10] sm:$0xff]
      %v190 = vld [vmem:[%s171 + $0x18] sm:$0xf]
      %191 = vst [vmem:[#allocation3] sm:$0xff] %v187
      %192 = vst [vmem:[#allocation3 + $0x8] sm:$0xf] %v188
      %193 = vst [vmem:[#allocation3 + $0xc] sm:$0xff] %v189
      %194 = vst [vmem:[#allocation3 + $0x14] sm:$0xf] %v190
      %v195 = vld [vmem:[%s171] sm:$0xff]
      %v196 = vld [vmem:[%s171 + $0x8] sm:$0xff]
      %v197 = vld [vmem:[%s171 + $0x10] sm:$0xff]
      %v198 = vld [vmem:[%s171 + $0x18] sm:$0xff]
      %203 = vrot.lane.b32.xlu0 %v195, 127
      %v204 = vpop.permute.xlu0 %203
      %205 = vrot.lane.b32.xlu0 %v196, 127
      %v206 = vpop.permute.xlu0 %205
      %207 = vrot.lane.b32.xlu0 %v197, 127
      %v208 = vpop.permute.xlu0 %207
      %209 = vrot.lane.b32.xlu0 %v198, 127
      %v210 = vpop.permute.xlu0 %209
      %v211 = vrot.slane %v204, 4
      %v212 = vrot.slane %v206, 4
      %v213 = vrot.slane %v208, 4
      %v214 = vrot.slane %v210, 4
      %vm215 = vcmask 1043456
      %v216 = vsel %vm215, %v211, %v212
      %vm217 = vcmask 1039360
      %v218 = vsel %vm217, %v204, %v216
      %v219 = vsel %vm217, %v206, %v212
      %v220 = vsel %vm215, %v213, %v214
      %v221 = vsel %vm217, %v208, %v220
      %v222 = vsel %vm217, %v210, %v214
      %227 = vst [vmem:[#allocation3 + $0x18] sm:$0xff] %v218
      %228 = vst [vmem:[#allocation3 + $0x20] sm:$0xf] %v219
      %229 = vst [vmem:[#allocation3 + $0x24] sm:$0xff] %v221
      %230 = vst [vmem:[#allocation3 + $0x2c] sm:$0xf] %v222
      %v231 = vld [vmem:[%s171] sm:$0xff]
      %v232 = vld [vmem:[%s171 + $0x8] sm:$0xff]
      %v233 = vld [vmem:[%s171 + $0x10] sm:$0xff]
      %v234 = vld [vmem:[%s171 + $0x18] sm:$0xff]
      %239 = vrot.lane.b32.xlu0 %v231, 126
      %v240 = vpop.permute.xlu0 %239
      %241 = vrot.lane.b32.xlu0 %v232, 126
      %v242 = vpop.permute.xlu0 %241
      %243 = vrot.lane.b32.xlu0 %v233, 126
      %v244 = vpop.permute.xlu0 %243
      %245 = vrot.lane.b32.xlu0 %v234, 126
      %v246 = vpop.permute.xlu0 %245
      %v247 = vrot.slane %v240, 4
      %v248 = vrot.slane %v242, 4
      %v249 = vrot.slane %v244, 4
      %v250 = vrot.slane %v246, 4
      %v251 = vsel %vm215, %v247, %v248
      %vm252 = vcmask 1031168
      %v253 = vsel %vm252, %v240, %v251
      %v254 = vsel %vm252, %v242, %v248
      %v255 = vsel %vm215, %v249, %v250
      %v256 = vsel %vm252, %v244, %v255
      %v257 = vsel %vm252, %v246, %v250
      %262 = vst [vmem:[#allocation3 + $0x30] sm:$0xff] %v253
      %263 = vst [vmem:[#allocation3 + $0x38] sm:$0xf] %v254
      %264 = vst [vmem:[#allocation3 + $0x3c] sm:$0xff] %v256
      %265 = vst [vmem:[#allocation3 + $0x44] sm:$0xf] %v257
      %v266 = vld [vmem:[%s171] sm:$0xff]
      %v267 = vld [vmem:[%s171 + $0x8] sm:$0xff]
      %v268 = vld [vmem:[%s171 + $0x10] sm:$0xff]
      %v269 = vld [vmem:[%s171 + $0x18] sm:$0xff]
      %274 = vrot.lane.b32.xlu0 %v266, 110
      %v275 = vpop.permute.xlu0 %274
      %276 = vrot.lane.b32.xlu0 %v267, 110
      %v277 = vpop.permute.xlu0 %276
      %278 = vrot.lane.b32.xlu0 %v268, 110
      %v279 = vpop.permute.xlu0 %278
      %280 = vrot.lane.b32.xlu0 %v269, 110
      %v281 = vpop.permute.xlu0 %280
      %v282 = vrot.slane %v275, 4
      %v283 = vrot.slane %v277, 4
      %v284 = vrot.slane %v279, 4
      %v285 = vrot.slane %v281, 4
      %v286 = vsel %vm215, %v282, %v283
      %vm287 = vcmask 900096
      %v288 = vsel %vm287, %v275, %v286
      %v289 = vsel %vm287, %v277, %v283
      %v290 = vsel %vm215, %v284, %v285
      %v291 = vsel %vm287, %v279, %v290
      %v292 = vsel %vm287, %v281, %v285
      %297 = vst [vmem:[#allocation3 + $0x48] sm:$0xff] %v288
      %298 = vst [vmem:[#allocation3 + $0x50] sm:$0xf] %v289
      %299 = vst [vmem:[#allocation3 + $0x54] sm:$0xff] %v291
      %300 = vst [vmem:[#allocation3 + $0x5c] sm:$0xf] %v292
      %v301 = vld [vmem:[%s171] sm:$0xff]
      %v302 = vld [vmem:[%s171 + $0x8] sm:$0xff]
      %v303 = vld [vmem:[%s171 + $0x10] sm:$0xff]
      %v304 = vld [vmem:[%s171 + $0x18] sm:$0xff]
      %309 = vrot.lane.b32.xlu0 %v301, 109
      %v310 = vpop.permute.xlu0 %309
      %311 = vrot.lane.b32.xlu0 %v302, 109
      %v312 = vpop.permute.xlu0 %311
      %313 = vrot.lane.b32.xlu0 %v303, 109
      %v314 = vpop.permute.xlu0 %313
      %315 = vrot.lane.b32.xlu0 %v304, 109
      %v316 = vpop.permute.xlu0 %315
      %v317 = vrot.slane %v310, 4
      %v318 = vrot.slane %v312, 4
      %v319 = vrot.slane %v314, 4
      %v320 = vrot.slane %v316, 4
      %v321 = vsel %vm215, %v317, %v318
      %vm322 = vcmask 891904
      %v323 = vsel %vm322, %v310, %v321
      %v324 = vsel %vm322, %v312, %v318
      %v325 = vsel %vm215, %v319, %v320
      %v326 = vsel %vm322, %v314, %v325
      %v327 = vsel %vm322, %v316, %v320
      %332 = vst [vmem:[#allocation3 + $0x60] sm:$0xff] %v323
      %333 = vst [vmem:[#allocation3 + $0x68] sm:$0xf] %v324
      %334 = vst [vmem:[#allocation3 + $0x6c] sm:$0xff] %v326
      %335 = vst [vmem:[#allocation3 + $0x74] sm:$0xf] %v327
      %v336 = vld [vmem:[%s171] sm:$0xff]
      %v337 = vld [vmem:[%s171 + $0x8] sm:$0xff]
      %v338 = vld [vmem:[%s171 + $0x10] sm:$0xff]
      %v339 = vld [vmem:[%s171 + $0x18] sm:$0xff]
      %344 = vrot.lane.b32.xlu0 %v336, 108
      %v345 = vpop.permute.xlu0 %344
      %346 = vrot.lane.b32.xlu0 %v337, 108
      %v347 = vpop.permute.xlu0 %346
      %348 = vrot.lane.b32.xlu0 %v338, 108
      %v349 = vpop.permute.xlu0 %348
      %350 = vrot.lane.b32.xlu0 %v339, 108
      %v351 = vpop.permute.xlu0 %350
      %v352 = vrot.slane %v345, 4
      %v353 = vrot.slane %v347, 4
      %v354 = vrot.slane %v349, 4
      %v355 = vrot.slane %v351, 4
      %v356 = vsel %vm215, %v352, %v353
      %vm357 = vcmask 883712
      %v358 = vsel %vm357, %v345, %v356
      %v359 = vsel %vm357, %v347, %v353
      %v360 = vsel %vm215, %v354, %v355
      %v361 = vsel %vm357, %v349, %v360
      %v362 = vsel %vm357, %v351, %v355
      %367 = vst [vmem:[#allocation3 + $0x78] sm:$0xff] %v358
      %368 = vst [vmem:[#allocation3 + $0x80] sm:$0xf] %v359
      %369 = vst [vmem:[#allocation3 + $0x84] sm:$0xff] %v361
      %370 = vst [vmem:[#allocation3 + $0x8c] sm:$0xf] %v362
      %v371 = vld [vmem:[%s171] sm:$0xff]
      %v372 = vld [vmem:[%s171 + $0x8] sm:$0xff]
      %v373 = vld [vmem:[%s171 + $0x10] sm:$0xff]
      %v374 = vld [vmem:[%s171 + $0x18] sm:$0xff]
      %379 = vrot.lane.b32.xlu0 %v371, 92
      %v380 = vpop.permute.xlu0 %379
      %381 = vrot.lane.b32.xlu0 %v372, 92
      %v382 = vpop.permute.xlu0 %381
      %383 = vrot.lane.b32.xlu0 %v373, 92
      %v384 = vpop.permute.xlu0 %383
      %385 = vrot.lane.b32.xlu0 %v374, 92
      %v386 = vpop.permute.xlu0 %385
      %v387 = vrot.slane %v380, 4
      %v388 = vrot.slane %v382, 4
      %v389 = vrot.slane %v384, 4
      %v390 = vrot.slane %v386, 4
      %v391 = vsel %vm215, %v387, %v388
      %vm392 = vcmask 752640
      %v393 = vsel %vm392, %v380, %v391
      %v394 = vsel %vm392, %v382, %v388
      %v395 = vsel %vm215, %v389, %v390
      %v396 = vsel %vm392, %v384, %v395
      %v397 = vsel %vm392, %v386, %v390
      %402 = vst [vmem:[#allocation3 + $0x90] sm:$0xff] %v393
      %403 = vst [vmem:[#allocation3 + $0x98] sm:$0xf] %v394
      %404 = vst [vmem:[#allocation3 + $0x9c] sm:$0xff] %v396
      %405 = vst [vmem:[#allocation3 + $0xa4] sm:$0xf] %v397
      %v406 = vld [vmem:[%s171] sm:$0xff]
      %v407 = vld [vmem:[%s171 + $0x8] sm:$0xff]
      %v408 = vld [vmem:[%s171 + $0x10] sm:$0xff]
      %v409 = vld [vmem:[%s171 + $0x18] sm:$0xff]
      %414 = vrot.lane.b32.xlu0 %v406, 91
      %v415 = vpop.permute.xlu0 %414
      %416 = vrot.lane.b32.xlu0 %v407, 91
      %v417 = vpop.permute.xlu0 %416
      %418 = vrot.lane.b32.xlu0 %v408, 91
      %v419 = vpop.permute.xlu0 %418
      %420 = vrot.lane.b32.xlu0 %v409, 91
      %v421 = vpop.permute.xlu0 %420
      %v422 = vrot.slane %v415, 4
      %v423 = vrot.slane %v417, 4
      %v424 = vrot.slane %v419, 4
      %v425 = vrot.slane %v421, 4
      %v426 = vsel %vm215, %v422, %v423
      %vm427 = vcmask 744448
      %v428 = vsel %vm427, %v415, %v426
      %v429 = vsel %vm427, %v417, %v423
      %v430 = vsel %vm215, %v424, %v425
      %v431 = vsel %vm427, %v419, %v430
      %v432 = vsel %vm427, %v421, %v425
      %437 = vst [vmem:[#allocation3 + $0xa8] sm:$0xff] %v428
      %438 = vst [vmem:[#allocation3 + $0xb0] sm:$0xf] %v429
      %439 = vst [vmem:[#allocation3 + $0xb4] sm:$0xff] %v431
      %440 = vst [vmem:[#allocation3 + $0xbc] sm:$0xf] %v432
      %v441 = vld [vmem:[%s171] sm:$0xff]
      %v442 = vld [vmem:[%s171 + $0x8] sm:$0xff]
      %v443 = vld [vmem:[%s171 + $0x10] sm:$0xff]
      %v444 = vld [vmem:[%s171 + $0x18] sm:$0xff]
      %449 = vrot.lane.b32.xlu0 %v441, 90
      %v450 = vpop.permute.xlu0 %449
      %451 = vrot.lane.b32.xlu0 %v442, 90
      %v452 = vpop.permute.xlu0 %451
      %453 = vrot.lane.b32.xlu0 %v443, 90
      %v454 = vpop.permute.xlu0 %453
      %455 = vrot.lane.b32.xlu0 %v444, 90
      %v456 = vpop.permute.xlu0 %455
      %v457 = vrot.slane %v450, 4
      %v458 = vrot.slane %v452, 4
      %v459 = vrot.slane %v454, 4
      %v460 = vrot.slane %v456, 4
      %v461 = vsel %vm215, %v457, %v458
      %vm462 = vcmask 736256
      %v463 = vsel %vm462, %v450, %v461
      %v464 = vsel %vm462, %v452, %v458
      %v465 = vsel %vm215, %v459, %v460
      %v466 = vsel %vm462, %v454, %v465
      %v467 = vsel %vm462, %v456, %v460
      %472 = vst [vmem:[#allocation3 + $0xc0] sm:$0xff] %v463
      %473 = vst [vmem:[#allocation3 + $0xc8] sm:$0xf] %v464
      %474 = vst [vmem:[#allocation3 + $0xcc] sm:$0xff] %v466
      %475 = vst [vmem:[#allocation3 + $0xd4] sm:$0xf] %v467
      %v476 = vld [vmem:[%s176] sm:$0xff]
      %v477 = vld [vmem:[#allocation3] sm:$0xff]
      %v478 = vld [vmem:[#allocation3 + $0x8] sm:$0xf]
      %v479 = vld [vmem:[#allocation3 + $0xc] sm:$0xff]
      %v480 = vld [vmem:[#allocation3 + $0x14] sm:$0xf]
      %v481 = vld [vmem:[#allocation3 + $0x18] sm:$0xff]
      %v482 = vld [vmem:[#allocation3 + $0x20] sm:$0xf]
      %v483 = vld [vmem:[#allocation3 + $0x24] sm:$0xff]
      %v484 = vld [vmem:[#allocation3 + $0x2c] sm:$0xf]
      %v485 = vld [vmem:[#allocation3 + $0x30] sm:$0xff]
      %v486 = vld [vmem:[#allocation3 + $0x38] sm:$0xf]
      %v487 = vld [vmem:[#allocation3 + $0x3c] sm:$0xff]
      %v488 = vld [vmem:[#allocation3 + $0x44] sm:$0xf]
      %v489 = vld [vmem:[#allocation3 + $0x48] sm:$0xff]
      %v490 = vld [vmem:[#allocation3 + $0x50] sm:$0xf]
      %v491 = vld [vmem:[#allocation3 + $0x54] sm:$0xff]
      %v492 = vld [vmem:[#allocation3 + $0x5c] sm:$0xf]
      %v493 = vld [vmem:[#allocation3 + $0x60] sm:$0xff]
      %v494 = vld [vmem:[#allocation3 + $0x68] sm:$0xf]
      %v495 = vld [vmem:[#allocation3 + $0x6c] sm:$0xff]
      %v496 = vld [vmem:[#allocation3 + $0x74] sm:$0xf]
      %v497 = vld [vmem:[#allocation3 + $0x78] sm:$0xff]
      %v498 = vld [vmem:[#allocation3 + $0x80] sm:$0xf]
      %v499 = vld [vmem:[#allocation3 + $0x84] sm:$0xff]
      %v500 = vld [vmem:[#allocation3 + $0x8c] sm:$0xf]
      %v501 = vld [vmem:[#allocation3 + $0x90] sm:$0xff]
      %v502 = vld [vmem:[#allocation3 + $0x98] sm:$0xf]
      %v503 = vld [vmem:[#allocation3 + $0x9c] sm:$0xff]
      %v504 = vld [vmem:[#allocation3 + $0xa4] sm:$0xf]
      %v505 = vld [vmem:[#allocation3 + $0xa8] sm:$0xff]
      %v506 = vld [vmem:[#allocation3 + $0xb0] sm:$0xf]
      %v507 = vld [vmem:[#allocation3 + $0xb4] sm:$0xff]
      %v508 = vld [vmem:[#allocation3 + $0xbc] sm:$0xf]
      %v509 = vld [vmem:[#allocation3 + $0xc0] sm:$0xff]
      %v510 = vld [vmem:[#allocation3 + $0xc8] sm:$0xf]
      %v511 = vld [vmem:[#allocation3 + $0xcc] sm:$0xff]
      %v512 = vld [vmem:[#allocation3 + $0xd4] sm:$0xf]
      %v514 = vunpack.c.l.b16 %v476
      %v515 = vunpack.c.h.b16 %v476
      %v516 = vpack.c.b16 %v514, %v514
      %v517 = vpack.c.b16 %v515, %v515
      %v555 = vunpack.c.l.b16 %v477
      %v556 = vunpack.c.h.b16 %v477
      %v557 = vunpack.c.l.b16 %v478
      %v558 = vunpack.c.l.b16 %v479
      %v559 = vunpack.c.h.b16 %v479
      %v560 = vunpack.c.l.b16 %v480
      %v561 = vunpack.c.l.b16 %v481
      %v562 = vunpack.c.h.b16 %v481
      %v563 = vunpack.c.l.b16 %v482
      %v564 = vunpack.c.l.b16 %v483
      %v565 = vunpack.c.h.b16 %v483
      %v566 = vunpack.c.l.b16 %v484
      %v567 = vunpack.c.l.b16 %v485
      %v568 = vunpack.c.h.b16 %v485
      %v569 = vunpack.c.l.b16 %v486
      %v570 = vunpack.c.l.b16 %v487
      %v571 = vunpack.c.h.b16 %v487
      %v572 = vunpack.c.l.b16 %v488
      %v573 = vunpack.c.l.b16 %v489
      %v574 = vunpack.c.h.b16 %v489
      %v575 = vunpack.c.l.b16 %v490
      %v576 = vunpack.c.l.b16 %v491
      %v577 = vunpack.c.h.b16 %v491
      %v578 = vunpack.c.l.b16 %v492
      %v579 = vunpack.c.l.b16 %v493
      %v580 = vunpack.c.h.b16 %v493
      %v581 = vunpack.c.l.b16 %v494
      %v582 = vunpack.c.l.b16 %v495
      %v583 = vunpack.c.h.b16 %v495
      %v584 = vunpack.c.l.b16 %v496
      %v585 = vunpack.c.l.b16 %v497
      %v586 = vunpack.c.h.b16 %v497
      %v587 = vunpack.c.l.b16 %v498
      %v588 = vunpack.c.l.b16 %v499
      %v589 = vunpack.c.h.b16 %v499
      %v590 = vunpack.c.l.b16 %v500
      %v591 = vunpack.c.l.b16 %v501
      %v592 = vunpack.c.h.b16 %v501
      %v593 = vunpack.c.l.b16 %v502
      %v594 = vunpack.c.l.b16 %v503
      %v595 = vunpack.c.h.b16 %v503
      %v596 = vunpack.c.l.b16 %v504
      %v597 = vunpack.c.l.b16 %v505
      %v598 = vunpack.c.h.b16 %v505
      %v599 = vunpack.c.l.b16 %v506
      %v600 = vunpack.c.l.b16 %v507
      %v601 = vunpack.c.h.b16 %v507
      %v602 = vunpack.c.l.b16 %v508
      %v603 = vunpack.c.l.b16 %v509
      %v604 = vunpack.c.h.b16 %v509
      %v605 = vunpack.c.l.b16 %v510
      %v606 = vunpack.c.l.b16 %v511
      %v607 = vunpack.c.h.b16 %v511
      %v608 = vunpack.c.l.b16 %v512
      %v609 = vpack.c.b16 %v558, %v555
      %v610 = vpack.c.b16 %v559, %v556
      %v611 = vpack.c.b16 %v560, %v557
      %v612 = vpack.c.b16 %v564, %v561
      %v613 = vpack.c.b16 %v565, %v562
      %v614 = vpack.c.b16 %v566, %v563
      %v615 = vpack.c.b16 %v570, %v567
      %v616 = vpack.c.b16 %v571, %v568
      %v617 = vpack.c.b16 %v572, %v569
      %v618 = vpack.c.b16 %v576, %v573
      %v619 = vpack.c.b16 %v577, %v574
      %v620 = vpack.c.b16 %v578, %v575
      %v621 = vpack.c.b16 %v582, %v579
      %v622 = vpack.c.b16 %v583, %v580
      %v623 = vpack.c.b16 %v584, %v581
      %v624 = vpack.c.b16 %v588, %v585
      %v625 = vpack.c.b16 %v589, %v586
      %v626 = vpack.c.b16 %v590, %v587
      %v627 = vpack.c.b16 %v594, %v591
      %v628 = vpack.c.b16 %v595, %v592
      %v629 = vpack.c.b16 %v596, %v593
      %v630 = vpack.c.b16 %v600, %v597
      %v631 = vpack.c.b16 %v601, %v598
      %v632 = vpack.c.b16 %v602, %v599
      %v633 = vpack.c.b16 %v606, %v603
      %v634 = vpack.c.b16 %v607, %v604
      %v635 = vpack.c.b16 %v608, %v605
      %vm663 = vcmask 130048
      %v665 = vsel %vm663, %v517, 0
      %667 = vmatpush.bf16.msra.mxu0 %v630
      %668 = vmatpush.bf16.msra.mxu0 %v627
      %669 = vmatpush.bf16.msra.mxu0 %v624
      %670 = vmatpush.bf16.msra.mxu0 %v621
      %671 = vmatpush.bf16.msra.mxu0 %v618
      %672 = vmatpush.bf16.msra.mxu0 %v615
      %673 = vmatpush.bf16.msra.mxu0 %v612
      %674 = vmatpush.bf16.msra.mxu0 %v609
      %675 = vmatmul.bf16.gmra.mxu0 %v516
      %v676 = vpop.f32.mrf.mxu0
      %v677 = vadd.f32 0.0, %v676
      %v678 = vpop.f32.mrf.mxu0
      %679 = vdwg.mxu0
      %680 = vmatpush.bf16.msra.mxu0 0
      %681 = vmatpush.bf16.msra.mxu0 0
      %682 = vmatpush.bf16.msra.mxu0 0
      %683 = vmatpush.bf16.msra.mxu0 0
      %684 = vmatpush.bf16.msra.mxu0 0
      %685 = vmatpush.bf16.msra.mxu0 0
      %686 = vmatpush.bf16.msra.mxu0 0
      %687 = vmatpush.bf16.msra.mxu0 %v633
      %688 = vmatmul.bf16.gmra.mxu0 %v665
      %v689 = vpop.f32.mrf.mxu0
      %v690 = vadd.f32 %v677, %v689
      %v691 = vpop.f32.mrf.mxu0
      %692 = vdwg.mxu0
      %693 = vmatpush.bf16.msra.mxu0 %v631
      %694 = vmatpush.bf16.msra.mxu0 %v628
      %695 = vmatpush.bf16.msra.mxu0 %v625
      %696 = vmatpush.bf16.msra.mxu0 %v622
      %697 = vmatpush.bf16.msra.mxu0 %v619
      %698 = vmatpush.bf16.msra.mxu0 %v616
      %699 = vmatpush.bf16.msra.mxu0 %v613
      %700 = vmatpush.bf16.msra.mxu0 %v610
      %701 = vmatmul.bf16.gmra.mxu0 %v516
      %v702 = vpop.f32.mrf.mxu0
      %v703 = vadd.f32 0.0, %v702
      %v704 = vpop.f32.mrf.mxu0
      %705 = vdwg.mxu0
      %706 = vmatpush.bf16.msra.mxu0 0
      %707 = vmatpush.bf16.msra.mxu0 0
      %708 = vmatpush.bf16.msra.mxu0 0
      %709 = vmatpush.bf16.msra.mxu0 0
      %710 = vmatpush.bf16.msra.mxu0 0
      %711 = vmatpush.bf16.msra.mxu0 0
      %712 = vmatpush.bf16.msra.mxu0 0
      %713 = vmatpush.bf16.msra.mxu0 %v634
      %714 = vmatmul.bf16.gmra.mxu0 %v665
      %v715 = vpop.f32.mrf.mxu0
      %v716 = vadd.f32 %v703, %v715
      %v717 = vpop.f32.mrf.mxu0
      %718 = vdwg.mxu0
      %719 = vmatpush.bf16.msra.mxu0 %v632
      %720 = vmatpush.bf16.msra.mxu0 %v629
      %721 = vmatpush.bf16.msra.mxu0 %v626
      %722 = vmatpush.bf16.msra.mxu0 %v623
      %723 = vmatpush.bf16.msra.mxu0 %v620
      %724 = vmatpush.bf16.msra.mxu0 %v617
      %725 = vmatpush.bf16.msra.mxu0 %v614
      %726 = vmatpush.bf16.msra.mxu0 %v611
      %727 = vmatmul.bf16.gmra.mxu0 %v516
      %v728 = vpop.f32.mrf.mxu0
      %v729 = vadd.f32 0.0, %v728
      %v730 = vpop.f32.mrf.mxu0
      %731 = vdwg.mxu0
      %732 = vmatpush.bf16.msra.mxu0 0
      %733 = vmatpush.bf16.msra.mxu0 0
      %734 = vmatpush.bf16.msra.mxu0 0
      %735 = vmatpush.bf16.msra.mxu0 0
      %736 = vmatpush.bf16.msra.mxu0 0
      %737 = vmatpush.bf16.msra.mxu0 0
      %738 = vmatpush.bf16.msra.mxu0 0
      %739 = vmatpush.bf16.msra.mxu0 %v635
      %740 = vmatmul.bf16.gmra.mxu0 %v665
      %v741 = vpop.f32.mrf.mxu0
      %v742 = vadd.f32 %v729, %v741
      %v743 = vpop.f32.mrf.mxu0
      %744 = vdwg.mxu0
      %745 = vst [vmem:[#allocation2] sm:$0xff] %v690
      %746 = vst [vmem:[#allocation2 + $0x8] sm:$0xff] %v716
      %747 = vst [vmem:[#allocation2 + $0x10] sm:$0xff] %v742
      %v748 = vld [vmem:[#allocation2] sm:$0xff]
      %v749 = vld [vmem:[#allocation2 + $0x8] sm:$0xff]
      %v750 = vld [vmem:[#allocation2 + $0x10] sm:$0xff]
      %v751 = vlaneseq
      %v752 = vand.u32 %v751, 127
      %v753 = vadd.s32 %v752, 128
      %v754 = vadd.s32 %v752, 256
      %vm755 = vcmp.lt.s32.totalorder %v752, 0
      %v756 = vsub.s32 0, %v752
      %v757 = vsel %vm755, %v756, %v752
      %v758 = vand.u32 %v757, 65535
      %v759 = vshrl.u32 %v757, 16
      %v761 = vmul.u32 %v758, 14564
      %v762 = vmul.u32 %v758, 58254
      %v763 = vmul.u32 %v759, 14564
      %v764 = vmul.u32 %v759, 58254
      %v765 = vshll.u32 %v762, 16
      %v766 = vshrl.u32 %v762, 16
      %v767 = vshll.u32 %v763, 16
      %v768 = vshrl.u32 %v763, 16
      %vm769 = vc.u32 %v761, %v765
      %v770 = vsel %vm769, 1, 0
      %v771 = vadd.s32 %v761, %v765
      %v772 = vadd.s32 %v764, %v770
      %vm773 = vc.u32 %v771, %v767
      %v774 = vsel %vm773, 1, 0
      %v775 = vadd.s32 %v771, %v767
      %v776 = vadd.s32 %v772, %v774
      %v777 = vadd.s32 %v776, %v766
      %v778 = vadd.s32 %v777, %v768
      %v779 = vshrl.u32 %v778, 4
      %v780 = vmul.u32 %v779, 18
      %v781 = vsub.s32 %v757, %v780
      %v782 = vsub.s32 0, %v781
      %v783 = vsel %vm755, %v782, %v781
      %vm784 = vcmp.lt.s32.totalorder %v753, 0
      %v785 = vsub.s32 0, %v753
      %v786 = vsel %vm784, %v785, %v753
      %v787 = vand.u32 %v786, 65535
      %v788 = vshrl.u32 %v786, 16
      %v790 = vmul.u32 %v787, 14564
      %v791 = vmul.u32 %v787, 58254
      %v792 = vmul.u32 %v788, 14564
      %v793 = vmul.u32 %v788, 58254
      %v794 = vshll.u32 %v791, 16
      %v795 = vshrl.u32 %v791, 16
      %v796 = vshll.u32 %v792, 16
      %v797 = vshrl.u32 %v792, 16
      %vm798 = vc.u32 %v790, %v794
      %v799 = vsel %vm798, 1, 0
      %v800 = vadd.s32 %v790, %v794
      %v801 = vadd.s32 %v793, %v799
      %vm802 = vc.u32 %v800, %v796
      %v803 = vsel %vm802, 1, 0
      %v804 = vadd.s32 %v800, %v796
      %v805 = vadd.s32 %v801, %v803
      %v806 = vadd.s32 %v805, %v795
      %v807 = vadd.s32 %v806, %v797
      %v808 = vshrl.u32 %v807, 4
      %v809 = vmul.u32 %v808, 18
      %v810 = vsub.s32 %v786, %v809
      %v811 = vsub.s32 0, %v810
      %v812 = vsel %vm784, %v811, %v810
      %vm813 = vcmp.lt.s32.totalorder %v754, 0
      %v814 = vsub.s32 0, %v754
      %v815 = vsel %vm813, %v814, %v754
      %v816 = vand.u32 %v815, 65535
      %v817 = vshrl.u32 %v815, 16
      %v819 = vmul.u32 %v816, 14564
      %v820 = vmul.u32 %v816, 58254
      %v821 = vmul.u32 %v817, 14564
      %v822 = vmul.u32 %v817, 58254
      %v823 = vshll.u32 %v820, 16
      %v824 = vshrl.u32 %v820, 16
      %v825 = vshll.u32 %v821, 16
      %v826 = vshrl.u32 %v821, 16
      %vm827 = vc.u32 %v819, %v823
      %v828 = vsel %vm827, 1, 0
      %v829 = vadd.s32 %v819, %v823
      %v830 = vadd.s32 %v822, %v828
      %vm831 = vc.u32 %v829, %v825
      %v832 = vsel %vm831, 1, 0
      %v833 = vadd.s32 %v829, %v825
      %v834 = vadd.s32 %v830, %v832
      %v835 = vadd.s32 %v834, %v824
      %v836 = vadd.s32 %v835, %v826
      %v837 = vshrl.u32 %v836, 4
      %v838 = vmul.u32 %v837, 18
      %v839 = vsub.s32 %v815, %v838
      %v840 = vsub.s32 0, %v839
      %v841 = vsel %vm813, %v840, %v839
      %vm842 = vcmp.ne.s32.totalorder %v783, 0
      %vm843 = vcmp.ne.s32.totalorder %v812, 0
      %vm844 = vcmp.ne.s32.totalorder %v841, 0
      %vm845 = vcmp.lt.s32.totalorder %v783, 0
      %vm846 = vcmp.lt.s32.totalorder %v812, 0
      %vm847 = vcmp.lt.s32.totalorder %v841, 0
      %vm848 = vmand %vm845, %vm842
      %vm849 = vmand %vm846, %vm843
      %vm850 = vmand %vm847, %vm844
      %v851 = vadd.s32 %v783, 18
      %v852 = vadd.s32 %v812, 18
      %v853 = vadd.s32 %v841, 18
      %v854 = vsel %vm848, %v851, %v783
      %v855 = vsel %vm849, %v852, %v812
      %v856 = vsel %vm850, %v853, %v841
      %vm857 = vcmp.lt.s32.totalorder %v854, 16
      %vm858 = vcmp.lt.s32.totalorder %v855, 16
      %vm859 = vcmp.lt.s32.totalorder %v856, 16
      %vm860 = vcmp.lt.s32.totalorder %v752, 288
      %vm861 = vcmp.lt.s32.totalorder %v753, 288
      %vm862 = vcmp.lt.s32.totalorder %v754, 288
      %vm863 = vmand %vm857, %vm860
      %vm864 = vmand %vm858, %vm861
      %vm865 = vmand %vm859, %vm862
      %v866 = vsel %vm863, 1, 0
      %v867 = vsel %vm864, 1, 0
      %v868 = vsel %vm865, 1, 0
      %v869 = vcvt.s32.f32 %v866
      %v870 = vcvt.s32.f32 %v867
      %v871 = vcvt.s32.f32 %v868
      %v872 = vmul.f32 %v748, %v869
      %v873 = vmul.f32 %v749, %v870
      %v874 = vmul.f32 %v750, %v871
      %v875 = vadd.f32 %v872, %v873
      %v876 = vadd.f32 %v875, %v874
      %877 = vadd.xlane.f32.xlu0 %v876
      %v878 = vpop.xlane.xlu0 %877
      %v879 = vmul.f32 %v878, 0.00390625
      %v880 = vsub.f32 %v748, %v879
      %v881 = vsub.f32 %v749, %v879
      %v882 = vsub.f32 %v750, %v879
      %v883 = vmul.f32 %v880, %v869
      %v884 = vmul.f32 %v881, %v870
      %v885 = vmul.f32 %v882, %v871
      %v886 = vmul.f32 %v883, %v883
      %v887 = vmul.f32 %v884, %v884
      %v888 = vmul.f32 %v885, %v885
      %v889 = vadd.f32 %v886, %v887
      %v890 = vadd.f32 %v889, %v888
      %891 = vadd.xlane.f32.xlu0 %v890
      %v892 = vpop.xlane.xlu0 %891
      %v893 = vmul.f32 %v892, 0.00390625
      %v894 = vadd.f32 %v893, 1e-05
      %v895 = vrsqrt.pop %v894
      %v896 = vmul.f32 %v895, %v894
      %v897 = vmul.f32 %v896, %v895
      %v898 = vmul.f32 0.5, %v897
      %v899 = vsub.f32 1.5, %v898
      %v900 = vmul.f32 %v895, %v899
      %vm901 = vweird.f32 %v894
      %vm902 = vweird.f32 %v895
      %vm903 = vmor %vm901, %vm902
      %v904 = vsel %vm903, %v895, %v900
      %v905 = vmul.f32 %v880, %v904
      %v906 = vmul.f32 %v881, %v904
      %v907 = vmul.f32 %v882, %v904
      %v908 = vmul.f32 %v905, 0.5
      %v909 = vmul.f32 %v906, 0.5
      %v910 = vmul.f32 %v907, 0.5
      %v911 = vmul.f32 %v905, 0.70710677
      %v912 = vmul.f32 %v906, 0.70710677
      %v913 = vmul.f32 %v907, 0.70710677
      %v914 = vmul.f32 %v911, %v911
      %v915 = vmin.f32 16.0, %v914
      %v916 = vmul.f32 %v915, 2.1237322e-06
      %v917 = vadd.f32 %v916, 0.00028619796
      %v918 = vmul.f32 %v915, %v917
      %v919 = vadd.f32 %v918, 0.0036580483
      %v920 = vmul.f32 %v915, %v919
      %v921 = vadd.f32 %v920, 0.05243302
      %v922 = vmul.f32 %v915, %v921
      %v923 = vadd.f32 %v922, 0.18741608
      %v924 = vmul.f32 %v915, %v923
      %v925 = vadd.f32 %v924, 1.1283791
      %v926 = vmul.f32 %v911, %v925
      %v927 = vmul.f32 %v915, 3.8918573e-05
      %v928 = vadd.f32 %v927, 0.001143296
      %v929 = vmul.f32 %v915, %v928
      %v930 = vadd.f32 %v929, 0.014752088
      %v931 = vmul.f32 %v915, %v930
      %v932 = vadd.f32 %v931, 0.112945676
      %v933 = vmul.f32 %v915, %v932
      %v934 = vadd.f32 %v933, 0.4994258
      %v935 = vmul.f32 %v915, %v934
      %v936 = vadd.f32 %v935, 1.0
      %v937 = vrcp.pop %v936
      %v938 = vmul.f32 %v936, %v937
      %v939 = vsub.f32 1.0, %v938
      %v940 = vmul.f32 %v937, %v939
      %v941 = vadd.f32 %v937, %v940
      %vm942 = vweird.f32 %v936
      %vm943 = vweird.f32 %v937
      %vm944 = vmor %vm942, %vm943
      %v945 = vsel %vm944, %v937, %v941
      %v946 = vand.u32 2147483647, %v936
      %vm947 = vcmp.eq.f32.partialorder %v946, 8.507059e+37
      %v948 = vand.u32 %v936, 2147483648
      %v949 = vor.u32 1.1754944e-38, %v948
      %v950 = vsel %vm947, %v949, %v945
      %v951 = vmul.f32 %v926, %v950
      %v952 = vmin.f32 %v951, 1.0
      %v953 = vmax.f32 %v952, -1.0
      %v954 = vmul.f32 %v912, %v912
      %v955 = vmin.f32 16.0, %v954
      %v956 = vmul.f32 %v955, 2.1237322e-06
      %v957 = vadd.f32 %v956, 0.00028619796
      %v958 = vmul.f32 %v955, %v957
      %v959 = vadd.f32 %v958, 0.0036580483
      %v960 = vmul.f32 %v955, %v959
      %v961 = vadd.f32 %v960, 0.05243302
      %v962 = vmul.f32 %v955, %v961
      %v963 = vadd.f32 %v962, 0.18741608
      %v964 = vmul.f32 %v955, %v963
      %v965 = vadd.f32 %v964, 1.1283791
      %v966 = vmul.f32 %v912, %v965
      %v967 = vmul.f32 %v955, 3.8918573e-05
      %v968 = vadd.f32 %v967, 0.001143296
      %v969 = vmul.f32 %v955, %v968
      %v970 = vadd.f32 %v969, 0.014752088
      %v971 = vmul.f32 %v955, %v970
      %v972 = vadd.f32 %v971, 0.112945676
      %v973 = vmul.f32 %v955, %v972
      %v974 = vadd.f32 %v973, 0.4994258
      %v975 = vmul.f32 %v955, %v974
      %v976 = vadd.f32 %v975, 1.0
      %v977 = vrcp.pop %v976
      %v978 = vmul.f32 %v976, %v977
      %v979 = vsub.f32 1.0, %v978
      %v980 = vmul.f32 %v977, %v979
      %v981 = vadd.f32 %v977, %v980
      %vm982 = vweird.f32 %v976
      %vm983 = vweird.f32 %v977
      %vm984 = vmor %vm982, %vm983
      %v985 = vsel %vm984, %v977, %v981
      %v986 = vand.u32 2147483647, %v976
      %vm987 = vcmp.eq.f32.partialorder %v986, 8.507059e+37
      %v988 = vand.u32 %v976, 2147483648
      %v989 = vor.u32 1.1754944e-38, %v988
      %v990 = vsel %vm987, %v989, %v985
      %v991 = vmul.f32 %v966, %v990
      %v992 = vmin.f32 %v991, 1.0
      %v993 = vmax.f32 %v992, -1.0
      %v994 = vmul.f32 %v913, %v913
      %v995 = vmin.f32 16.0, %v994
      %v996 = vmul.f32 %v995, 2.1237322e-06
      %v997 = vadd.f32 %v996, 0.00028619796
      %v998 = vmul.f32 %v995, %v997
      %v999 = vadd.f32 %v998, 0.0036580483
      %v1000 = vmul.f32 %v995, %v999
      %v1001 = vadd.f32 %v1000, 0.05243302
      %v1002 = vmul.f32 %v995, %v1001
      %v1003 = vadd.f32 %v1002, 0.18741608
      %v1004 = vmul.f32 %v995, %v1003
      %v1005 = vadd.f32 %v1004, 1.1283791
      %v1006 = vmul.f32 %v913, %v1005
      %v1007 = vmul.f32 %v995, 3.8918573e-05
      %v1008 = vadd.f32 %v1007, 0.001143296
      %v1009 = vmul.f32 %v995, %v1008
      %v1010 = vadd.f32 %v1009, 0.014752088
      %v1011 = vmul.f32 %v995, %v1010
      %v1012 = vadd.f32 %v1011, 0.112945676
      %v1013 = vmul.f32 %v995, %v1012
      %v1014 = vadd.f32 %v1013, 0.4994258
      %v1015 = vmul.f32 %v995, %v1014
      %v1016 = vadd.f32 %v1015, 1.0
      %v1017 = vrcp.pop %v1016
      %v1018 = vmul.f32 %v1016, %v1017
      %v1019 = vsub.f32 1.0, %v1018
      %v1020 = vmul.f32 %v1017, %v1019
      %v1021 = vadd.f32 %v1017, %v1020
      %vm1022 = vweird.f32 %v1016
      %vm1023 = vweird.f32 %v1017
      %vm1024 = vmor %vm1022, %vm1023
      %v1025 = vsel %vm1024, %v1017, %v1021
      %v1026 = vand.u32 2147483647, %v1016
      %vm1027 = vcmp.eq.f32.partialorder %v1026, 8.507059e+37
      %v1028 = vand.u32 %v1016, 2147483648
      %v1029 = vor.u32 1.1754944e-38, %v1028
      %v1030 = vsel %vm1027, %v1029, %v1025
      %v1031 = vmul.f32 %v1006, %v1030
      %v1032 = vmin.f32 %v1031, 1.0
      %v1033 = vmax.f32 %v1032, -1.0
      %v1034 = vadd.f32 %v953, 1.0
      %v1035 = vadd.f32 %v993, 1.0
      %v1036 = vadd.f32 %v1033, 1.0
      %v1037 = vmul.f32 %v908, %v1034
      %v1038 = vmul.f32 %v909, %v1035
      %v1039 = vmul.f32 %v910, %v1036
      %1040 = vst [vmem:[%s185] sm:$0xff] %v1037
      %1041 = vst [vmem:[%s185 + $0x8] sm:$0xff] %v1038
      %1042 = vst [vmem:[%s185 + $0x10] sm:$0xff] %v1039
      %p1043 = scmp.lt.s32.totalorder %s17, 1
      %s1044 = scalar_select %p1043, %s17, 1
      %p1045 = scmp.lt.s32.totalorder %s18, 0
      %s1046 = scalar_select %p1045, %s18, 0
      %s1047 = smul.addr %s1046, 3
      %s1048 = smul.addr %s1044, 3
      %s1049 = sadd.s32 %s1047, %s1048
      %s1050 = smul.addr %s1049, 8
      %s1051 = scalar_lea.vmem %s2, %s1050
      // Predicated region
      $region29: #{basic_conv.1} parent=27 // pred_check
        %p1052 = pneg %p97
      $region30: #{basic_conv.1} parent=27 // pred_check_branch
        %1054 = sbr.rel (%p1052) target = $region32
      $region31: #{basic_conv.1} parent=27 // pred_region
        _
      $region32: #{basic_conv.1} parent=27 // pred_fallthru
        _
    $region28: #{basic_conv.1} parent=5 // pred_fallthru
      _
    %p1055 = scmp.le.s32.totalorder 2, %s8
    // Predicated region
    $region33: #{basic_conv.1} parent=5 // pred_check
      %p1056 = pneg %p1055
    $region34: #{basic_conv.1} parent=5 // pred_check_branch
      %1058 = sbr.rel (%p1056) target = $region36
    $region35: #{basic_conv.1} parent=5 // pred_region
      %s1059 = ssub.s32 %s8, 2
      // Predicated region
      $region37: #{basic_conv.1} parent=35 // pred_check
        %p1060 = pneg %p103
      $region38: #{basic_conv.1} parent=35 // pred_check_branch
        %1062 = sbr.rel (%p1060) target = $region40
      $region39: #{basic_conv.1} parent=35 // pred_region
        %p1063 = scmp.lt.s32.totalorder %s19, 1
        %s1064 = scalar_select %p1063, %s19, 1
        %p1065 = scmp.lt.s32.totalorder %s20, 0
        %s1066 = scalar_select %p1065, %s20, 0
        %s1067 = smul.addr %s1066, 3
        %s1068 = smul.addr %s1064, 3
        %s1069 = sadd.s32 %s1067, %s1068
        %s1070 = smul.addr %s1069, 8
        %s1071 = scalar_lea.vmem %s2, %s1070
      $region40: #{basic_conv.1} parent=35 // pred_fallthru
        _
    $region36: #{basic_conv.1} parent=5 // pred_fallthru
      _
  $region6: #{basic_conv.1} parent=0 // loop_footer
    %s12 = sadd.s32 1, %s8
  $region7: #{basic_conv.1} parent=0 // loop_footer_branch
    %7 = sbr.rel target = $region3
  $region8: #{basic_conv.1} parent=0 // loop_exit
    _

</llo_original>
